<compile_context>
chip_gen: v7x
topology: tpu7x:2x2x1
jax: 0.10.0
libtpu: 0.0.40
codegen_flags: <defaults>
</compile_context>

<pallas_src>
import jax
import jax.numpy as jnp
from jax import lax
from jax.experimental import pallas as pl
from jax.experimental.pallas import tpu as pltpu


def spatial_attn_kernel(x_ref, w_ref, o_ref):
    # x_ref: (TB, C, L) VMEM   w_ref: (2, K) SMEM   o_ref: (TB, L) VMEM
    TB, C, L = x_ref.shape
    K = w_ref.shape[1]
    pad = (K - 1) // 2

    # Single load of the tile; fused sum + max channel reduction (one pass).
    x = x_ref[...].astype(jnp.float32)                 # (TB, C, L)
    s = x[:, 0, :]
    m = x[:, 0, :]
    for c in range(1, C):
        v = x[:, c, :]
        s = s + v
        m = jnp.maximum(m, v)
    avg = s * (1.0 / C)                                 # (TB, L)

    lane = lax.broadcasted_iota(jnp.int32, (1, L), 1)   # broadcasts over TB rows
    acc = jnp.zeros((TB, L), jnp.float32)

    # Conv1d(2 -> 1, kernel K, zero padding) as K static shift-and-mask taps.
    for k in range(K):
        off = k - pad                                   # static python int
        shift = (-off) % L                              # rolled[l] = src[l + off]
        s_avg = pltpu.roll(avg, shift=shift, axis=1)    # XLU lane rotation
        s_max = pltpu.roll(m, shift=shift, axis=1)
        valid = jnp.logical_and(lane + off >= 0, lane + off < L)
        # Weight + add first, then a single select per tap for the zero pad.
        acc = acc + jnp.where(valid,
                              w_ref[0, k] * s_avg + w_ref[1, k] * s_max,
                              0.0)

    o_ref[...] = jax.nn.sigmoid(acc).astype(o_ref.dtype)


def _choose_batch_block(B, C, L, itemsize):
    """Largest legal batch block that fits the default scoped VMEM budget."""
    # Double-buffered input tile + f32 intermediates + double-buffered output.
    per_row = 2 * C * L * itemsize + 6 * L * 4
    budget = 12 << 20          # stays under v5e's 16 MiB default scoped VMEM
    cap = max(1, budget // max(per_row, 1))
    # TB must divide B and either be a multiple of 8 (sublane-dense output
    # block) or equal the full batch, so the (TB, L) output BlockSpec is legal.
    for tb in range(min(B, cap), 0, -1):
        if B % tb == 0 and (tb % 8 == 0 or tb == B):
            return tb
    return B


def spatial_attention(x, w):
    """x: (B, C, L) float32; w: (2, K) float32 (conv weight squeezed of out-ch)."""
    B, C, L = x.shape
    TB = _choose_batch_block(B, C, L, x.dtype.itemsize)
    out = pl.pallas_call(
        spatial_attn_kernel,
        out_shape=jax.ShapeDtypeStruct((B, L), x.dtype),
        grid=(B // TB,),
        in_specs=[
            pl.BlockSpec((TB, C, L), lambda b: (b, 0, 0)),
            pl.BlockSpec(memory_space=pltpu.MemorySpace.SMEM),
        ],
        out_specs=pl.BlockSpec((TB, L), lambda b: (b, 0)),
        compiler_params=pltpu.CompilerParams(
            dimension_semantics=("parallel",)),
    )(x, w)
    return out[:, None, :]        # (B, 1, L) to match the PyTorch module


def reference(x, w):
    avg = jnp.mean(x, axis=1, keepdims=True)
    mx = jnp.max(x, axis=1, keepdims=True)
    cat = jnp.concatenate([avg, mx], axis=1)            # (B, 2, L)
    K = w.shape[1]
    out = lax.conv_general_dilated(
        cat, w[None, :, :],                             # (O=1, I=2, K)
        window_strides=(1,), padding=[((K - 1) // 2, (K - 1) // 2)],
        dimension_numbers=("NCH", "OIH", "NCH"))
    return jax.nn.sigmoid(out)


if __name__ == "__main__":
    key = jax.random.PRNGKey(0)
    kx, kw = jax.random.split(key)

    B, C, L, K = 8, 4, 128, 7
    x = jax.random.normal(kx, (B, C, L), dtype=jnp.float32)

    # Deterministic kaiming_normal_ init for Conv1d weight (1, 2, K):
    # fan_in = 2*K, gain = sqrt(2)  =>  std = sqrt(2 / (2*K))
    std = (2.0 / (2 * K)) ** 0.5
    w = (jax.random.normal(kw, (2, K), dtype=jnp.float32) * std)

    out = spatial_attention(x, w)
    out = jax.block_until_ready(out)

    ref = reference(x, w)
    assert out.shape == (B, 1, L)
    assert jnp.allclose(out, ref, atol=1e-5, rtol=1e-5)
    print("KERNEL_OK")
</pallas_src>

<mosaic_0001>
module attributes {stable_mosaic.version = 11 : i64} {
  func.func @spatial_attn_kernel(%arg0: i32, %arg1: memref<8x4x128xf32, #tpu.memory_space<vmem>>, %arg2: memref<2x7xf32, #tpu.memory_space<smem>>, %arg3: memref<8x128xf32, #tpu.memory_space<vmem>>) attributes {dimension_semantics = [#tpu.dimension_semantics<parallel>], iteration_bounds = array<i64: 1>, scalar_prefetch = 0 : i64, scratch_operands = 0 : i64, tpu.core_type = #tpu.core_type<tc>, window_params = [{transform_indices = @transform_0, window_bounds = array<i64: 8, 4, 128>}, {transform_indices = @transform_1, window_bounds = array<i64: 2, 7>}, {transform_indices = @transform_2, window_bounds = array<i64: 8, 128>}]} {
    %c0 = arith.constant 0 : index
    %c0_0 = arith.constant 0 : index
    %c0_1 = arith.constant 0 : index
    %0 = vector.load %arg1[%c0, %c0_0, %c0_1] : memref<8x4x128xf32, #tpu.memory_space<vmem>>, vector<8x4x128xf32>
    %1 = vector.extract_strided_slice %0 {offsets = [0, 0, 0], sizes = [8, 1, 128], strides = [1, 1, 1]} : vector<8x4x128xf32> to vector<8x1x128xf32>
    %2 = vector.shape_cast %1 : vector<8x1x128xf32> to vector<8x128xf32>
    %3 = vector.extract_strided_slice %0 {offsets = [0, 0, 0], sizes = [8, 1, 128], strides = [1, 1, 1]} : vector<8x4x128xf32> to vector<8x1x128xf32>
    %4 = vector.shape_cast %3 : vector<8x1x128xf32> to vector<8x128xf32>
    %5 = vector.extract_strided_slice %0 {offsets = [0, 1, 0], sizes = [8, 1, 128], strides = [1, 1, 1]} : vector<8x4x128xf32> to vector<8x1x128xf32>
    %6 = vector.shape_cast %5 : vector<8x1x128xf32> to vector<8x128xf32>
    %7 = arith.addf %2, %6 : vector<8x128xf32>
    %8 = arith.maximumf %4, %6 : vector<8x128xf32>
    %9 = vector.extract_strided_slice %0 {offsets = [0, 2, 0], sizes = [8, 1, 128], strides = [1, 1, 1]} : vector<8x4x128xf32> to vector<8x1x128xf32>
    %10 = vector.shape_cast %9 : vector<8x1x128xf32> to vector<8x128xf32>
    %11 = arith.addf %7, %10 : vector<8x128xf32>
    %12 = arith.maximumf %8, %10 : vector<8x128xf32>
    %13 = vector.extract_strided_slice %0 {offsets = [0, 3, 0], sizes = [8, 1, 128], strides = [1, 1, 1]} : vector<8x4x128xf32> to vector<8x1x128xf32>
    %14 = vector.shape_cast %13 : vector<8x1x128xf32> to vector<8x128xf32>
    %15 = arith.addf %11, %14 : vector<8x128xf32>
    %16 = arith.maximumf %12, %14 : vector<8x128xf32>
    %cst = arith.constant 2.500000e-01 : f32
    %17 = vector.broadcast %cst : f32 to vector<8x128xf32>
    %18 = arith.mulf %15, %17 : vector<8x128xf32>
    %19 = tpu.iota {dimensions = array<i32: 1>} : vector<1x128xi32>
    %cst_2 = arith.constant 0.000000e+00 : f32
    %20 = vector.broadcast %cst_2 : f32 to vector<8x128xf32>
    %c3_i32 = arith.constant 3 : i32
    %21 = tpu.dynamic_rotate %18 by %c3_i32 dim 1 : vector<8x128xf32>, i32 -> vector<8x128xf32>
    %c3_i32_3 = arith.constant 3 : i32
    %22 = tpu.dynamic_rotate %16 by %c3_i32_3 dim 1 : vector<8x128xf32>, i32 -> vector<8x128xf32>
    %c-3_i32 = arith.constant -3 : i32
    %23 = vector.broadcast %c-3_i32 : i32 to vector<1x128xi32>
    %24 = arith.addi %19, %23 : vector<1x128xi32>
    %c0_i32 = arith.constant 0 : i32
    %25 = vector.broadcast %c0_i32 : i32 to vector<1x128xi32>
    %26 = arith.cmpi sge, %24, %25 : vector<1x128xi32>
    %c-3_i32_4 = arith.constant -3 : i32
    %27 = vector.broadcast %c-3_i32_4 : i32 to vector<1x128xi32>
    %28 = arith.addi %19, %27 : vector<1x128xi32>
    %c128_i32 = arith.constant 128 : i32
    %29 = vector.broadcast %c128_i32 : i32 to vector<1x128xi32>
    %30 = arith.cmpi slt, %28, %29 : vector<1x128xi32>
    %31 = arith.andi %26, %30 : vector<1x128xi1>
    %c0_5 = arith.constant 0 : index
    %c0_6 = arith.constant 0 : index
    %32 = memref.load %arg2[%c0_5, %c0_6] : memref<2x7xf32, #tpu.memory_space<smem>>
    %33 = vector.broadcast %32 : f32 to vector<8x128xf32>
    %34 = arith.mulf %33, %21 : vector<8x128xf32>
    %c1 = arith.constant 1 : index
    %c0_7 = arith.constant 0 : index
    %35 = memref.load %arg2[%c1, %c0_7] : memref<2x7xf32, #tpu.memory_space<smem>>
    %36 = vector.broadcast %35 : f32 to vector<8x128xf32>
    %37 = arith.mulf %36, %22 : vector<8x128xf32>
    %38 = arith.addf %34, %37 : vector<8x128xf32>
    %cst_8 = arith.constant 0.000000e+00 : f32
    %39 = vector.shape_cast %31 : vector<1x128xi1> to vector<1x128xi1>
    %40 = vector.broadcast %39 : vector<1x128xi1> to vector<8x128xi1>
    %41 = vector.broadcast %cst_8 : f32 to vector<8x128xf32>
    %42 = arith.select %40, %38, %41 : vector<8x128xi1>, vector<8x128xf32>
    %43 = arith.addf %20, %42 : vector<8x128xf32>
    %c2_i32 = arith.constant 2 : i32
    %44 = tpu.dynamic_rotate %18 by %c2_i32 dim 1 : vector<8x128xf32>, i32 -> vector<8x128xf32>
    %c2_i32_9 = arith.constant 2 : i32
    %45 = tpu.dynamic_rotate %16 by %c2_i32_9 dim 1 : vector<8x128xf32>, i32 -> vector<8x128xf32>
    %c-2_i32 = arith.constant -2 : i32
    %46 = vector.broadcast %c-2_i32 : i32 to vector<1x128xi32>
    %47 = arith.addi %19, %46 : vector<1x128xi32>
    %c0_i32_10 = arith.constant 0 : i32
    %48 = vector.broadcast %c0_i32_10 : i32 to vector<1x128xi32>
    %49 = arith.cmpi sge, %47, %48 : vector<1x128xi32>
    %c-2_i32_11 = arith.constant -2 : i32
    %50 = vector.broadcast %c-2_i32_11 : i32 to vector<1x128xi32>
    %51 = arith.addi %19, %50 : vector<1x128xi32>
    %c128_i32_12 = arith.constant 128 : i32
    %52 = vector.broadcast %c128_i32_12 : i32 to vector<1x128xi32>
    %53 = arith.cmpi slt, %51, %52 : vector<1x128xi32>
    %54 = arith.andi %49, %53 : vector<1x128xi1>
    %c0_13 = arith.constant 0 : index
    %c1_14 = arith.constant 1 : index
    %55 = memref.load %arg2[%c0_13, %c1_14] : memref<2x7xf32, #tpu.memory_space<smem>>
    %56 = vector.broadcast %55 : f32 to vector<8x128xf32>
    %57 = arith.mulf %56, %44 : vector<8x128xf32>
    %c1_15 = arith.constant 1 : index
    %c1_16 = arith.constant 1 : index
    %58 = memref.load %arg2[%c1_15, %c1_16] : memref<2x7xf32, #tpu.memory_space<smem>>
    %59 = vector.broadcast %58 : f32 to vector<8x128xf32>
    %60 = arith.mulf %59, %45 : vector<8x128xf32>
    %61 = arith.addf %57, %60 : vector<8x128xf32>
    %cst_17 = arith.constant 0.000000e+00 : f32
    %62 = vector.shape_cast %54 : vector<1x128xi1> to vector<1x128xi1>
    %63 = vector.broadcast %62 : vector<1x128xi1> to vector<8x128xi1>
    %64 = vector.broadcast %cst_17 : f32 to vector<8x128xf32>
    %65 = arith.select %63, %61, %64 : vector<8x128xi1>, vector<8x128xf32>
    %66 = arith.addf %43, %65 : vector<8x128xf32>
    %c1_i32 = arith.constant 1 : i32
    %67 = tpu.dynamic_rotate %18 by %c1_i32 dim 1 : vector<8x128xf32>, i32 -> vector<8x128xf32>
    %c1_i32_18 = arith.constant 1 : i32
    %68 = tpu.dynamic_rotate %16 by %c1_i32_18 dim 1 : vector<8x128xf32>, i32 -> vector<8x128xf32>
    %c-1_i32 = arith.constant -1 : i32
    %69 = vector.broadcast %c-1_i32 : i32 to vector<1x128xi32>
    %70 = arith.addi %19, %69 : vector<1x128xi32>
    %c0_i32_19 = arith.constant 0 : i32
    %71 = vector.broadcast %c0_i32_19 : i32 to vector<1x128xi32>
    %72 = arith.cmpi sge, %70, %71 : vector<1x128xi32>
    %c-1_i32_20 = arith.constant -1 : i32
    %73 = vector.broadcast %c-1_i32_20 : i32 to vector<1x128xi32>
    %74 = arith.addi %19, %73 : vector<1x128xi32>
    %c128_i32_21 = arith.constant 128 : i32
    %75 = vector.broadcast %c128_i32_21 : i32 to vector<1x128xi32>
    %76 = arith.cmpi slt, %74, %75 : vector<1x128xi32>
    %77 = arith.andi %72, %76 : vector<1x128xi1>
    %c0_22 = arith.constant 0 : index
    %c2 = arith.constant 2 : index
    %78 = memref.load %arg2[%c0_22, %c2] : memref<2x7xf32, #tpu.memory_space<smem>>
    %79 = vector.broadcast %78 : f32 to vector<8x128xf32>
    %80 = arith.mulf %79, %67 : vector<8x128xf32>
    %c1_23 = arith.constant 1 : index
    %c2_24 = arith.constant 2 : index
    %81 = memref.load %arg2[%c1_23, %c2_24] : memref<2x7xf32, #tpu.memory_space<smem>>
    %82 = vector.broadcast %81 : f32 to vector<8x128xf32>
    %83 = arith.mulf %82, %68 : vector<8x128xf32>
    %84 = arith.addf %80, %83 : vector<8x128xf32>
    %cst_25 = arith.constant 0.000000e+00 : f32
    %85 = vector.shape_cast %77 : vector<1x128xi1> to vector<1x128xi1>
    %86 = vector.broadcast %85 : vector<1x128xi1> to vector<8x128xi1>
    %87 = vector.broadcast %cst_25 : f32 to vector<8x128xf32>
    %88 = arith.select %86, %84, %87 : vector<8x128xi1>, vector<8x128xf32>
    %89 = arith.addf %66, %88 : vector<8x128xf32>
    %c0_i32_26 = arith.constant 0 : i32
    %90 = tpu.dynamic_rotate %18 by %c0_i32_26 dim 1 : vector<8x128xf32>, i32 -> vector<8x128xf32>
    %c0_i32_27 = arith.constant 0 : i32
    %91 = tpu.dynamic_rotate %16 by %c0_i32_27 dim 1 : vector<8x128xf32>, i32 -> vector<8x128xf32>
    %c0_i32_28 = arith.constant 0 : i32
    %92 = vector.broadcast %c0_i32_28 : i32 to vector<1x128xi32>
    %93 = arith.addi %19, %92 : vector<1x128xi32>
    %c0_i32_29 = arith.constant 0 : i32
    %94 = vector.broadcast %c0_i32_29 : i32 to vector<1x128xi32>
    %95 = arith.cmpi sge, %93, %94 : vector<1x128xi32>
    %c0_i32_30 = arith.constant 0 : i32
    %96 = vector.broadcast %c0_i32_30 : i32 to vector<1x128xi32>
    %97 = arith.addi %19, %96 : vector<1x128xi32>
    %c128_i32_31 = arith.constant 128 : i32
    %98 = vector.broadcast %c128_i32_31 : i32 to vector<1x128xi32>
    %99 = arith.cmpi slt, %97, %98 : vector<1x128xi32>
    %100 = arith.andi %95, %99 : vector<1x128xi1>
    %c0_32 = arith.constant 0 : index
    %c3 = arith.constant 3 : index
    %101 = memref.load %arg2[%c0_32, %c3] : memref<2x7xf32, #tpu.memory_space<smem>>
    %102 = vector.broadcast %101 : f32 to vector<8x128xf32>
    %103 = arith.mulf %102, %90 : vector<8x128xf32>
    %c1_33 = arith.constant 1 : index
    %c3_34 = arith.constant 3 : index
    %104 = memref.load %arg2[%c1_33, %c3_34] : memref<2x7xf32, #tpu.memory_space<smem>>
    %105 = vector.broadcast %104 : f32 to vector<8x128xf32>
    %106 = arith.mulf %105, %91 : vector<8x128xf32>
    %107 = arith.addf %103, %106 : vector<8x128xf32>
    %cst_35 = arith.constant 0.000000e+00 : f32
    %108 = vector.shape_cast %100 : vector<1x128xi1> to vector<1x128xi1>
    %109 = vector.broadcast %108 : vector<1x128xi1> to vector<8x128xi1>
    %110 = vector.broadcast %cst_35 : f32 to vector<8x128xf32>
    %111 = arith.select %109, %107, %110 : vector<8x128xi1>, vector<8x128xf32>
    %112 = arith.addf %89, %111 : vector<8x128xf32>
    %c127_i32 = arith.constant 127 : i32
    %113 = tpu.dynamic_rotate %18 by %c127_i32 dim 1 : vector<8x128xf32>, i32 -> vector<8x128xf32>
    %c127_i32_36 = arith.constant 127 : i32
    %114 = tpu.dynamic_rotate %16 by %c127_i32_36 dim 1 : vector<8x128xf32>, i32 -> vector<8x128xf32>
    %c1_i32_37 = arith.constant 1 : i32
    %115 = vector.broadcast %c1_i32_37 : i32 to vector<1x128xi32>
    %116 = arith.addi %19, %115 : vector<1x128xi32>
    %c0_i32_38 = arith.constant 0 : i32
    %117 = vector.broadcast %c0_i32_38 : i32 to vector<1x128xi32>
    %118 = arith.cmpi sge, %116, %117 : vector<1x128xi32>
    %c1_i32_39 = arith.constant 1 : i32
    %119 = vector.broadcast %c1_i32_39 : i32 to vector<1x128xi32>
    %120 = arith.addi %19, %119 : vector<1x128xi32>
    %c128_i32_40 = arith.constant 128 : i32
    %121 = vector.broadcast %c128_i32_40 : i32 to vector<1x128xi32>
    %122 = arith.cmpi slt, %120, %121 : vector<1x128xi32>
    %123 = arith.andi %118, %122 : vector<1x128xi1>
    %c0_41 = arith.constant 0 : index
    %c4 = arith.constant 4 : index
    %124 = memref.load %arg2[%c0_41, %c4] : memref<2x7xf32, #tpu.memory_space<smem>>
    %125 = vector.broadcast %124 : f32 to vector<8x128xf32>
    %126 = arith.mulf %125, %113 : vector<8x128xf32>
    %c1_42 = arith.constant 1 : index
    %c4_43 = arith.constant 4 : index
    %127 = memref.load %arg2[%c1_42, %c4_43] : memref<2x7xf32, #tpu.memory_space<smem>>
    %128 = vector.broadcast %127 : f32 to vector<8x128xf32>
    %129 = arith.mulf %128, %114 : vector<8x128xf32>
    %130 = arith.addf %126, %129 : vector<8x128xf32>
    %cst_44 = arith.constant 0.000000e+00 : f32
    %131 = vector.shape_cast %123 : vector<1x128xi1> to vector<1x128xi1>
    %132 = vector.broadcast %131 : vector<1x128xi1> to vector<8x128xi1>
    %133 = vector.broadcast %cst_44 : f32 to vector<8x128xf32>
    %134 = arith.select %132, %130, %133 : vector<8x128xi1>, vector<8x128xf32>
    %135 = arith.addf %112, %134 : vector<8x128xf32>
    %c126_i32 = arith.constant 126 : i32
    %136 = tpu.dynamic_rotate %18 by %c126_i32 dim 1 : vector<8x128xf32>, i32 -> vector<8x128xf32>
    %c126_i32_45 = arith.constant 126 : i32
    %137 = tpu.dynamic_rotate %16 by %c126_i32_45 dim 1 : vector<8x128xf32>, i32 -> vector<8x128xf32>
    %c2_i32_46 = arith.constant 2 : i32
    %138 = vector.broadcast %c2_i32_46 : i32 to vector<1x128xi32>
    %139 = arith.addi %19, %138 : vector<1x128xi32>
    %c0_i32_47 = arith.constant 0 : i32
    %140 = vector.broadcast %c0_i32_47 : i32 to vector<1x128xi32>
    %141 = arith.cmpi sge, %139, %140 : vector<1x128xi32>
    %c2_i32_48 = arith.constant 2 : i32
    %142 = vector.broadcast %c2_i32_48 : i32 to vector<1x128xi32>
    %143 = arith.addi %19, %142 : vector<1x128xi32>
    %c128_i32_49 = arith.constant 128 : i32
    %144 = vector.broadcast %c128_i32_49 : i32 to vector<1x128xi32>
    %145 = arith.cmpi slt, %143, %144 : vector<1x128xi32>
    %146 = arith.andi %141, %145 : vector<1x128xi1>
    %c0_50 = arith.constant 0 : index
    %c5 = arith.constant 5 : index
    %147 = memref.load %arg2[%c0_50, %c5] : memref<2x7xf32, #tpu.memory_space<smem>>
    %148 = vector.broadcast %147 : f32 to vector<8x128xf32>
    %149 = arith.mulf %148, %136 : vector<8x128xf32>
    %c1_51 = arith.constant 1 : index
    %c5_52 = arith.constant 5 : index
    %150 = memref.load %arg2[%c1_51, %c5_52] : memref<2x7xf32, #tpu.memory_space<smem>>
    %151 = vector.broadcast %150 : f32 to vector<8x128xf32>
    %152 = arith.mulf %151, %137 : vector<8x128xf32>
    %153 = arith.addf %149, %152 : vector<8x128xf32>
    %cst_53 = arith.constant 0.000000e+00 : f32
    %154 = vector.shape_cast %146 : vector<1x128xi1> to vector<1x128xi1>
    %155 = vector.broadcast %154 : vector<1x128xi1> to vector<8x128xi1>
    %156 = vector.broadcast %cst_53 : f32 to vector<8x128xf32>
    %157 = arith.select %155, %153, %156 : vector<8x128xi1>, vector<8x128xf32>
    %158 = arith.addf %135, %157 : vector<8x128xf32>
    %c125_i32 = arith.constant 125 : i32
    %159 = tpu.dynamic_rotate %18 by %c125_i32 dim 1 : vector<8x128xf32>, i32 -> vector<8x128xf32>
    %c125_i32_54 = arith.constant 125 : i32
    %160 = tpu.dynamic_rotate %16 by %c125_i32_54 dim 1 : vector<8x128xf32>, i32 -> vector<8x128xf32>
    %c3_i32_55 = arith.constant 3 : i32
    %161 = vector.broadcast %c3_i32_55 : i32 to vector<1x128xi32>
    %162 = arith.addi %19, %161 : vector<1x128xi32>
    %c0_i32_56 = arith.constant 0 : i32
    %163 = vector.broadcast %c0_i32_56 : i32 to vector<1x128xi32>
    %164 = arith.cmpi sge, %162, %163 : vector<1x128xi32>
    %c3_i32_57 = arith.constant 3 : i32
    %165 = vector.broadcast %c3_i32_57 : i32 to vector<1x128xi32>
    %166 = arith.addi %19, %165 : vector<1x128xi32>
    %c128_i32_58 = arith.constant 128 : i32
    %167 = vector.broadcast %c128_i32_58 : i32 to vector<1x128xi32>
    %168 = arith.cmpi slt, %166, %167 : vector<1x128xi32>
    %169 = arith.andi %164, %168 : vector<1x128xi1>
    %c0_59 = arith.constant 0 : index
    %c6 = arith.constant 6 : index
    %170 = memref.load %arg2[%c0_59, %c6] : memref<2x7xf32, #tpu.memory_space<smem>>
    %171 = vector.broadcast %170 : f32 to vector<8x128xf32>
    %172 = arith.mulf %171, %159 : vector<8x128xf32>
    %c1_60 = arith.constant 1 : index
    %c6_61 = arith.constant 6 : index
    %173 = memref.load %arg2[%c1_60, %c6_61] : memref<2x7xf32, #tpu.memory_space<smem>>
    %174 = vector.broadcast %173 : f32 to vector<8x128xf32>
    %175 = arith.mulf %174, %160 : vector<8x128xf32>
    %176 = arith.addf %172, %175 : vector<8x128xf32>
    %cst_62 = arith.constant 0.000000e+00 : f32
    %177 = vector.shape_cast %169 : vector<1x128xi1> to vector<1x128xi1>
    %178 = vector.broadcast %177 : vector<1x128xi1> to vector<8x128xi1>
    %179 = vector.broadcast %cst_62 : f32 to vector<8x128xf32>
    %180 = arith.select %178, %176, %179 : vector<8x128xi1>, vector<8x128xf32>
    %181 = arith.addf %158, %180 : vector<8x128xf32>
    %182 = arith.negf %181 : vector<8x128xf32>
    %183 = math.exp %182 : vector<8x128xf32>
    %cst_63 = arith.constant 1.000000e+00 : f32
    %184 = vector.broadcast %cst_63 : f32 to vector<8x128xf32>
    %185 = arith.addf %184, %183 : vector<8x128xf32>
    %186 = arith.divf %184, %185 : vector<8x128xf32>
    %c0_64 = arith.constant 0 : index
    %c0_65 = arith.constant 0 : index
    %187 = vector.load %arg3[%c0_64, %c0_65] : memref<8x128xf32, #tpu.memory_space<vmem>>, vector<8x128xf32>
    tpu.vector_store %arg3[%c0_64, %c0_65], %186 {strides = array<i32>} : memref<8x128xf32, #tpu.memory_space<vmem>>, vector<8x128xf32>,
    return
  }
  func.func @transform_0(%arg0: i32) -> (i32, i32, i32) {
    %c0_i32 = arith.constant 0 : i32
    %c0_i32_0 = arith.constant 0 : i32
    %c0_i32_1 = arith.constant 0 : i32
    return %arg0, %c0_i32, %c0_i32_0 : i32, i32, i32
  }
  func.func @transform_1(%arg0: i32) -> (i32, i32) {
    %c0_i32 = arith.constant 0 : i32
    %c0_i32_0 = arith.constant 0 : i32
    %c0_i32_1 = arith.constant 0 : i32
    return %c0_i32, %c0_i32_0 : i32, i32
  }
  func.func @transform_2(%arg0: i32) -> (i32, i32) {
    %c0_i32 = arith.constant 0 : i32
    %c0_i32_0 = arith.constant 0 : i32
    return %arg0, %c0_i32 : i32, i32
  }
}

</mosaic_0001>

<llo_original>
// kernel: tpu_custom_call.1
$region0: #{tpu_custom_call.1}
  #allocation0 [shape = 'u32[]', space=smem, size = 0x4, offset = 0x4, fixed_abs, tag = 'smem constant byte address 0x4 - core index']
  #allocation1 [shape = 'u32[144,128]{1,0:T(1,128)}', space=vmem, size = 0x12000, scoped, tag = 'internal scratch']
  %s0 = inlined_call_operand.hbm [shape: f32[8,4,128], index: 0, kind: input, shape index: {}]
  %s1 = inlined_call_operand.vmem [shape: f32[2,7], index: 1, kind: input, shape index: {}]
  %s2 = inlined_call_operand.hbm [shape: f32[8,128], index: 2, kind: output, shape index: {}]
  %s3 = sld [smem:[#allocation0]]
  $region26: #{tpu_custom_call.1} parent=0
    _
  %s5 = ssub.s32 1, %s3
  %s6 = scalar_select 0, %s5, %s3
  $region1: #{tpu_custom_call.1} parent=0
    #allocation2 [shape = 'u8[16384]{0}', space=vmem, size = 0x4000, scoped, tag = 'input window, operand 0, single buffered']
    #allocation3 [shape = 's32[1]{0}', space=sflag, size = 0x4, scoped, tag = 'scoped memory for tpu_custom_call.1']
    #allocation4 [shape = 's32[1]{0}', space=sflag, size = 0x4, scoped, tag = 'scoped memory for tpu_custom_call.1']
    #allocation5 [shape = 's32[1]{0}', space=sflag, size = 0x4, scoped, tag = 'scoped memory for tpu_custom_call.1']
    #allocation6 [shape = 'u8[1024]{0}', space=smem, size = 0x400, scoped, tag = 'input window, operand 1, single buffered']
    #allocation7 [shape = 'u8[4096]{0}', space=vmem, size = 0x1000, scoped, tag = 'output window, operand 0, single buffered']
    %7 = vsyncpa [#allocation3], 0
    %8 = vsyncpa [#allocation5], 0
    %9 = vsyncpa [#allocation4], 0
    // Predicated region
    $region2: #{tpu_custom_call.1} parent=1 // pred_check
      _
    $region3: #{tpu_custom_call.1} parent=1 // pred_check_branch
      %11 = sbr.rel (0) target = $region5
    $region4: #{tpu_custom_call.1} parent=1 // pred_region
      %s13 = ssub.s32 512, 512
      %14 = vsyncadd [#allocation3], %s13
      %s15 = sshll.u32 [#allocation2], 4
      %s16 = int_to_ptr.vmem [resolvable:$true] %s15
      %21 = dma.hbm_to_vmem [thread:$0]  %s0, 512, %s16, [#allocation3], 64, 64, 4
    $region5: #{tpu_custom_call.1} parent=1 // pred_fallthru
      _
    // Predicated region
    $region6: #{tpu_custom_call.1} parent=1 // pred_check
      _
    $region7: #{tpu_custom_call.1} parent=1 // pred_check_branch
      %23 = sbr.rel (0) target = $region9
    $region8: #{tpu_custom_call.1} parent=1 // pred_region
      %s25 = ssub.s32 32, 32
      %26 = vsyncadd [#allocation5], %s25
      %s28 = sshll.u32 %s1, 4
      %s29 = int_to_ptr.vmem [resolvable:$true] %s28
      %31 = dma.vmem_to_smem %s29, 32, [#allocation6], [#allocation5]
    $region9: #{tpu_custom_call.1} parent=1 // pred_fallthru
      _
    // Predicated region
    $region10: #{tpu_custom_call.1} parent=1 // pred_check
      _
    $region11: #{tpu_custom_call.1} parent=1 // pred_check_branch
      %33 = sbr.rel (0) target = $region13
    $region12: #{tpu_custom_call.1} parent=1 // pred_region
      %34 = dma.done [#allocation3], 512
    $region13: #{tpu_custom_call.1} parent=1 // pred_fallthru
      _
    // Predicated region
    $region14: #{tpu_custom_call.1} parent=1 // pred_check
      _
    $region15: #{tpu_custom_call.1} parent=1 // pred_check_branch
      %36 = sbr.rel (0) target = $region17
    $region16: #{tpu_custom_call.1} parent=1 // pred_region
      %37 = dma.done [#allocation5], 32
    $region17: #{tpu_custom_call.1} parent=1 // pred_fallthru
      _
    %38 = sfence
    %v39 = vld [vmem:[#allocation2] sm:$0xf]
    %v40 = vld [vmem:[#allocation2 + $0x4] sm:$0xf]
    %v41 = vld [vmem:[#allocation2 + $0x8] sm:$0xf]
    %v42 = vld [vmem:[#allocation2 + $0xc] sm:$0xf]
    %v43 = vld [vmem:[#allocation2 + $0x10] sm:$0xf]
    %v44 = vld [vmem:[#allocation2 + $0x14] sm:$0xf]
    %v45 = vld [vmem:[#allocation2 + $0x18] sm:$0xf]
    %v46 = vld [vmem:[#allocation2 + $0x1c] sm:$0xf]
    %v55 = vrot.slane %v39, 1
    %v56 = vrot.slane %v40, 1
    %v57 = vrot.slane %v41, 1
    %v58 = vrot.slane %v42, 1
    %v59 = vrot.slane %v43, 1
    %v60 = vrot.slane %v44, 1
    %v61 = vrot.slane %v45, 1
    %v62 = vrot.slane %v46, 1
    %v71 = vadd.f32 %v39, %v55
    %v72 = vadd.f32 %v40, %v56
    %v73 = vadd.f32 %v41, %v57
    %v74 = vadd.f32 %v42, %v58
    %v75 = vadd.f32 %v43, %v59
    %v76 = vadd.f32 %v44, %v60
    %v77 = vadd.f32 %v45, %v61
    %v78 = vadd.f32 %v46, %v62
    %v79 = vmax.f32 %v39, %v55
    %v80 = vmax.f32 %v40, %v56
    %v81 = vmax.f32 %v41, %v57
    %v82 = vmax.f32 %v42, %v58
    %v83 = vmax.f32 %v43, %v59
    %v84 = vmax.f32 %v44, %v60
    %v85 = vmax.f32 %v45, %v61
    %v86 = vmax.f32 %v46, %v62
    %v87 = vrot.slane %v39, 2
    %v88 = vrot.slane %v40, 2
    %v89 = vrot.slane %v41, 2
    %v90 = vrot.slane %v42, 2
    %v91 = vrot.slane %v43, 2
    %v92 = vrot.slane %v44, 2
    %v93 = vrot.slane %v45, 2
    %v94 = vrot.slane %v46, 2
    %v103 = vadd.f32 %v71, %v87
    %v104 = vadd.f32 %v72, %v88
    %v105 = vadd.f32 %v73, %v89
    %v106 = vadd.f32 %v74, %v90
    %v107 = vadd.f32 %v75, %v91
    %v108 = vadd.f32 %v76, %v92
    %v109 = vadd.f32 %v77, %v93
    %v110 = vadd.f32 %v78, %v94
    %v111 = vmax.f32 %v79, %v87
    %v112 = vmax.f32 %v80, %v88
    %v113 = vmax.f32 %v81, %v89
    %v114 = vmax.f32 %v82, %v90
    %v115 = vmax.f32 %v83, %v91
    %v116 = vmax.f32 %v84, %v92
    %v117 = vmax.f32 %v85, %v93
    %v118 = vmax.f32 %v86, %v94
    %v119 = vrot.slane %v39, 3
    %v120 = vrot.slane %v40, 3
    %v121 = vrot.slane %v41, 3
    %v122 = vrot.slane %v42, 3
    %v123 = vrot.slane %v43, 3
    %v124 = vrot.slane %v44, 3
    %v125 = vrot.slane %v45, 3
    %v126 = vrot.slane %v46, 3
    %v135 = vadd.f32 %v103, %v119
    %v136 = vadd.f32 %v104, %v120
    %v137 = vadd.f32 %v105, %v121
    %v138 = vadd.f32 %v106, %v122
    %v139 = vadd.f32 %v107, %v123
    %v140 = vadd.f32 %v108, %v124
    %v141 = vadd.f32 %v109, %v125
    %v142 = vadd.f32 %v110, %v126
    %v143 = vmax.f32 %v111, %v119
    %v144 = vmax.f32 %v112, %v120
    %v145 = vmax.f32 %v113, %v121
    %v146 = vmax.f32 %v114, %v122
    %v147 = vmax.f32 %v115, %v123
    %v148 = vmax.f32 %v116, %v124
    %v149 = vmax.f32 %v117, %v125
    %v150 = vmax.f32 %v118, %v126
    %v151 = vmul.f32 %v135, 0.25
    %v152 = vmul.f32 %v136, 0.25
    %v153 = vmul.f32 %v137, 0.25
    %v154 = vmul.f32 %v138, 0.25
    %v155 = vmul.f32 %v139, 0.25
    %v156 = vmul.f32 %v140, 0.25
    %v157 = vmul.f32 %v141, 0.25
    %v158 = vmul.f32 %v142, 0.25
    %v159 = vlaneseq
    %v160 = vand.u32 %v159, 127
    %v169 = vrot.slane %v152, 7
    %vm170 = vcmask 1041409
    %v171 = vsel %vm170, %v169, %v151
    %v172 = vrot.slane %v153, 6
    %vm173 = vcmask 1042434
    %v174 = vsel %vm173, %v172, %v171
    %v175 = vrot.slane %v154, 5
    %vm176 = vcmask 1043459
    %v177 = vsel %vm176, %v175, %v174
    %v178 = vrot.slane %v155, 4
    %vm179 = vcmask 1044484
    %v180 = vsel %vm179, %v178, %v177
    %v181 = vrot.slane %v156, 3
    %vm182 = vcmask 1045509
    %v183 = vsel %vm182, %v181, %v180
    %v184 = vrot.slane %v157, 2
    %vm185 = vcmask 1046534
    %v186 = vsel %vm185, %v184, %v183
    %v187 = vrot.slane %v158, 1
    %vm188 = vcmask 1047559
    %v189 = vsel %vm188, %v187, %v186
    %191 = vrot.lane.b32.xlu0 %v189, 3
    %v192 = vpop.permute.xlu0 %191
    %v201 = vrot.slane %v144, 7
    %v202 = vsel %vm170, %v201, %v143
    %v203 = vrot.slane %v145, 6
    %v204 = vsel %vm173, %v203, %v202
    %v205 = vrot.slane %v146, 5
    %v206 = vsel %vm176, %v205, %v204
    %v207 = vrot.slane %v147, 4
    %v208 = vsel %vm179, %v207, %v206
    %v209 = vrot.slane %v148, 3
    %v210 = vsel %vm182, %v209, %v208
    %v211 = vrot.slane %v149, 2
    %v212 = vsel %vm185, %v211, %v210
    %v213 = vrot.slane %v150, 1
    %v214 = vsel %vm188, %v213, %v212
    %216 = vrot.lane.b32.xlu0 %v214, 3
    %v217 = vpop.permute.xlu0 %216
    %v218 = vadd.s32 %v160, 4294967293
    %vm219 = vcmp.ge.s32.totalorder %v218, 0
    %vm220 = vcmp.lt.s32.totalorder %v218, 128
    %vm221 = vmand %vm219, %vm220
    %s222 = sld [smem:[#allocation6]]
    %v223 = vstv %s222
    %v224 = vmul.f32 %v223, %v192
    %s225 = sld [smem:[#allocation6 + $0x80]]
    %v226 = vstv %s225
    %v227 = vmul.f32 %v226, %v217
    %v228 = vadd.f32 %v224, %v227
    %v229 = vsel %vm221, 1, 0
    %vm230 = vcmp.eq.s32.totalorder %v229, 1
    %v231 = vsel %vm230, %v228, 0.0
    %v232 = vadd.f32 %v231, 0.0
    %233 = vrot.lane.b32.xlu0 %v189, 2
    %v234 = vpop.permute.xlu0 %233
    %235 = vrot.lane.b32.xlu0 %v214, 2
    %v236 = vpop.permute.xlu0 %235
    %v237 = vadd.s32 %v160, 4294967294
    %vm238 = vcmp.ge.s32.totalorder %v237, 0
    %vm239 = vcmp.lt.s32.totalorder %v237, 128
    %vm240 = vmand %vm238, %vm239
    %s241 = sld [smem:[#allocation6 + $0x1]]
    %v242 = vstv %s241
    %v243 = vmul.f32 %v242, %v234
    %s244 = sld [smem:[#allocation6 + $0x81]]
    %v245 = vstv %s244
    %v246 = vmul.f32 %v245, %v236
    %v247 = vadd.f32 %v243, %v246
    %v248 = vsel %vm240, 1, 0
    %vm249 = vcmp.eq.s32.totalorder %v248, 1
    %v250 = vsel %vm249, %v247, 0.0
    %v251 = vadd.f32 %v232, %v250
    %252 = vrot.lane.b32.xlu0 %v189, 1
    %v253 = vpop.permute.xlu0 %252
    %254 = vrot.lane.b32.xlu0 %v214, 1
    %v255 = vpop.permute.xlu0 %254
    %v256 = vadd.s32 %v160, 4294967295
    %vm257 = vcmp.ge.s32.totalorder %v256, 0
    %vm258 = vcmp.lt.s32.totalorder %v256, 128
    %vm259 = vmand %vm257, %vm258
    %s260 = sld [smem:[#allocation6 + $0x2]]
    %v261 = vstv %s260
    %v262 = vmul.f32 %v261, %v253
    %s263 = sld [smem:[#allocation6 + $0x82]]
    %v264 = vstv %s263
    %v265 = vmul.f32 %v264, %v255
    %v266 = vadd.f32 %v262, %v265
    %v267 = vsel %vm259, 1, 0
    %vm268 = vcmp.eq.s32.totalorder %v267, 1
    %v269 = vsel %vm268, %v266, 0.0
    %v270 = vadd.f32 %v251, %v269
    %vm271 = vcmp.ge.s32.totalorder %v160, 0
    %vm272 = vcmp.lt.s32.totalorder %v160, 128
    %vm273 = vmand %vm271, %vm272
    %s274 = sld [smem:[#allocation6 + $0x3]]
    %v275 = vstv %s274
    %v276 = vmul.f32 %v275, %v189
    %s277 = sld [smem:[#allocation6 + $0x83]]
    %v278 = vstv %s277
    %v279 = vmul.f32 %v278, %v214
    %v280 = vadd.f32 %v276, %v279
    %v281 = vsel %vm273, 1, 0
    %vm282 = vcmp.eq.s32.totalorder %v281, 1
    %v283 = vsel %vm282, %v280, 0.0
    %v284 = vadd.f32 %v270, %v283
    %285 = vrot.lane.b32.xlu0 %v189, 127
    %v286 = vpop.permute.xlu0 %285
    %287 = vrot.lane.b32.xlu0 %v214, 127
    %v288 = vpop.permute.xlu0 %287
    %v289 = vadd.s32 %v160, 1
    %vm290 = vcmp.ge.s32.totalorder %v289, 0
    %vm291 = vcmp.lt.s32.totalorder %v289, 128
    %vm292 = vmand %vm290, %vm291
    %s293 = sld [smem:[#allocation6 + $0x4]]
    %v294 = vstv %s293
    %v295 = vmul.f32 %v294, %v286
    %s296 = sld [smem:[#allocation6 + $0x84]]
    %v297 = vstv %s296
    %v298 = vmul.f32 %v297, %v288
    %v299 = vadd.f32 %v295, %v298
    %v300 = vsel %vm292, 1, 0
    %vm301 = vcmp.eq.s32.totalorder %v300, 1
    %v302 = vsel %vm301, %v299, 0.0
    %v303 = vadd.f32 %v284, %v302
    %304 = vrot.lane.b32.xlu0 %v189, 126
    %v305 = vpop.permute.xlu0 %304
    %306 = vrot.lane.b32.xlu0 %v214, 126
    %v307 = vpop.permute.xlu0 %306
    %v308 = vadd.s32 %v160, 2
    %vm309 = vcmp.ge.s32.totalorder %v308, 0
    %vm310 = vcmp.lt.s32.totalorder %v308, 128
    %vm311 = vmand %vm309, %vm310
    %s312 = sld [smem:[#allocation6 + $0x5]]
    %v313 = vstv %s312
    %v314 = vmul.f32 %v313, %v305
    %s315 = sld [smem:[#allocation6 + $0x85]]
    %v316 = vstv %s315
    %v317 = vmul.f32 %v316, %v307
    %v318 = vadd.f32 %v314, %v317
    %v319 = vsel %vm311, 1, 0
    %vm320 = vcmp.eq.s32.totalorder %v319, 1
    %v321 = vsel %vm320, %v318, 0.0
    %v322 = vadd.f32 %v303, %v321
    %323 = vrot.lane.b32.xlu0 %v189, 125
    %v324 = vpop.permute.xlu0 %323
    %325 = vrot.lane.b32.xlu0 %v214, 125
    %v326 = vpop.permute.xlu0 %325
    %v327 = vadd.s32 %v160, 3
    %vm328 = vcmp.ge.s32.totalorder %v327, 0
    %vm329 = vcmp.lt.s32.totalorder %v327, 128
    %vm330 = vmand %vm328, %vm329
    %s331 = sld [smem:[#allocation6 + $0x6]]
    %v332 = vstv %s331
    %v333 = vmul.f32 %v332, %v324
    %s334 = sld [smem:[#allocation6 + $0x86]]
    %v335 = vstv %s334
    %v336 = vmul.f32 %v335, %v326
    %v337 = vadd.f32 %v333, %v336
    %v338 = vsel %vm330, 1, 0
    %vm339 = vcmp.eq.s32.totalorder %v338, 1
    %v340 = vsel %vm339, %v337, 0.0
    %v341 = vadd.f32 %v322, %v340
    %v342 = vxor.u32 %v341, 2147483648
    %v343 = vmul.f32 %v342, 1.442695
    %v344 = vpow.pop %v343
    %v345 = vadd.f32 %v344, 1.0
    %v346 = vrcp.pop %v345
    %v347 = vmul.f32 1.0, %v346
    %348 = vst [vmem:[#allocation7] sm:$0xff] %v347
    // Predicated region
    $region18: #{tpu_custom_call.1} parent=1 // pred_check
      _
    $region19: #{tpu_custom_call.1} parent=1 // pred_check_branch
      %350 = sbr.rel (0) target = $region21
    $region20: #{tpu_custom_call.1} parent=1 // pred_region
      %s352 = ssub.s32 128, 128
      %353 = vsyncadd [#allocation4], %s352
      %s355 = sshll.u32 [#allocation7], 4
      %s356 = int_to_ptr.vmem [resolvable:$true] %s355
      %358 = dma.vmem_to_hbm [thread:$0]  %s356, 128, %s2, [#allocation4]
    $region21: #{tpu_custom_call.1} parent=1 // pred_fallthru
      _
    // Predicated region
    $region22: #{tpu_custom_call.1} parent=1 // pred_check
      _
    $region23: #{tpu_custom_call.1} parent=1 // pred_check_branch
      %360 = sbr.rel (0) target = $region25
    $region24: #{tpu_custom_call.1} parent=1 // pred_region
      %361 = dma.done [#allocation4], 128
    $region25: #{tpu_custom_call.1} parent=1 // pred_fallthru
      _
    %362 = vsyncpa [#allocation3], 1
    %363 = vsyncpa [#allocation4], 1
    %364 = vsyncpa [#allocation5], 1

</llo_original>
